<compile_context>
chip_gen: v7x
topology: tpu7x:2x2x1
jax: 0.10.0
libtpu: 0.0.40
codegen_flags: <defaults>
</compile_context>

<pallas_src>
import math

import jax
import jax.numpy as jnp
from jax.experimental import pallas as pl
from jax.experimental.pallas import tpu as pltpu


# Batch rows per grid step.  2048 amortizes per-step pipeline overhead while
# keeping double-buffered state/output blocks + f32 intermediates a few MiB —
# comfortably inside v7x's 32 MiB scoped / 64 MiB physical VMEM and v5e's
# 16 MiB scoped default (we raise the scoped limit to 32 MiB anyway).
_MAX_BATCH_TILE = 2048
# Below this, use a single whole-batch tile (splitting could not be
# 128-aligned, and one tile keeps the block shapes legal for any B).
_SINGLE_TILE_MAX = 256


def _round_up(x, m):
    return ((x + m - 1) // m) * m


def actor_kernel(state_ref, w1_ref, b1_ref, w2_ref, b2_ref, w3t_ref, b3_ref,
                 out_ref):
    # state_ref: (TM, n_in) -- the size-1 middle dim of the (B, 1, n_in) state
    # is squeezed by the BlockSpec (fuses torch.squeeze(state, 1)).  The state
    # is already fp32 at the pallas_call boundary (torch `.float()`), so cast
    # once to bf16 MXU operands; accumulation below is fp32.
    x = state_ref[...].astype(jnp.bfloat16)

    # Layer 1: Linear + ReLU (bias add / ReLU in fp32; safe on v5e's VPU).
    h1 = jnp.dot(x, w1_ref[...], preferred_element_type=jnp.float32)
    h1 = jnp.maximum(h1 + b1_ref[...], 0.0)

    # Layer 2: Linear + ReLU.
    h2 = jnp.dot(h1.astype(jnp.bfloat16), w2_ref[...],
                 preferred_element_type=jnp.float32)
    h2 = jnp.maximum(h2 + b2_ref[...], 0.0)

    # Layer 3: Linear, computed directly in transposed form
    #   a_t[o, m] = sum_k w3t[o, k] * h2[m, k]      (A @ B^T on the MXU)
    # so the stored block is (n_out, TM): last dim TM is lane-dense ->
    # unmasked full-lane stores instead of per-row masked vst on 2 lanes.
    a_t = jax.lax.dot_general(
        w3t_ref[...], h2.astype(jnp.bfloat16),
        dimension_numbers=(((1,), (1,)), ((), ())),
        preferred_element_type=jnp.float32)
    out_ref[...] = (a_t + b3_ref[...]).astype(out_ref.dtype)


def actor_forward(state, params):
    """state: (B, 1, n_input) -> action: (B, n_output), float32."""
    w1, b1, w2, b2, w3t, b3 = params
    B, one, n_in = state.shape
    assert one == 1, "expected state of shape (B, 1, n_input)"
    n_feat = w1.shape[1]
    n_out = w3t.shape[0]

    # Batch tile selection:
    #  * small B: one whole-batch tile.
    #  * larger B: 128-aligned tile giving >= 2 grid steps (so the "parallel"
    #    batch axis shards across v7x's two TensorCores), capped at
    #    _MAX_BATCH_TILE for VMEM headroom on v7x / v5e.
    if B <= _SINGLE_TILE_MAX:
        tm = B
    else:
        tm = min(_MAX_BATCH_TILE, _round_up(pl.cdiv(B, 2), 128))
    grid = (pl.cdiv(B, tm),)

    def resident(shape):
        # Same block index every grid step -> the block stays in VMEM and is
        # DMA'd from HBM once.  Buffered(1): a constant block gains nothing
        # from the default double buffer, so halve its VMEM footprint.
        idx_map = lambda i: (0,) * len(shape)
        try:
            return pl.BlockSpec(shape, idx_map, pipeline_mode=pl.Buffered(1))
        except (TypeError, AttributeError):
            # Older jax without pipeline_mode / Buffered: plain resident spec.
            return pl.BlockSpec(shape, idx_map)

    flops = 2 * B * (n_in * n_feat + n_feat * n_feat + n_feat * n_out)
    bytes_accessed = (
        int(state.size) * state.dtype.itemsize
        + sum(int(p.size) * p.dtype.itemsize for p in params)
        + B * n_out * 4
    )

    out_t = pl.pallas_call(
        actor_kernel,
        # Transposed (n_out, B) output so in-kernel stores are lane-dense.
        out_shape=jax.ShapeDtypeStruct((n_out, B), jnp.float32),
        grid=grid,
        in_specs=[
            # (tm, 1, n_in) block; middle (size-1) dim squeezed out of the ref.
            pl.BlockSpec((tm, None, n_in), lambda i: (i, 0, 0)),
            resident(w1.shape), resident(b1.shape),
            resident(w2.shape), resident(b2.shape),
            resident(w3t.shape), resident(b3.shape),
        ],
        out_specs=pl.BlockSpec((n_out, tm), lambda i: (0, i)),
        compiler_params=pltpu.CompilerParams(
            # Batch axis is embarrassingly parallel -> shard across v7x's two
            # TensorCores; harmless on single-TC v5e/v6e.
            dimension_semantics=("parallel",),
            # Explicit scoped-VMEM budget for the larger batch tile: matches
            # the v6e/v7x 32 MiB default, lifts v5e's 16 MiB default, and is
            # well under v7x's 64 MiB physical VMEM.
            vmem_limit_bytes=32 * 1024 * 1024,
        ),
        cost_estimate=pl.CostEstimate(
            flops=flops, bytes_accessed=bytes_accessed, transcendentals=0),
    )(state, w1, b1, w2, b2, w3t, b3)

    # Tiny (n_out, B) -> (B, n_out) transpose outside the kernel; fuses with
    # downstream consumers under jit.
    return out_t.T


def xavier_uniform(key, fan_in, fan_out, shape, gain):
    # Matches torch.nn.init.xavier_uniform_ (uniform in [-a, a]).
    a = gain * math.sqrt(6.0 / (fan_in + fan_out))
    return jax.random.uniform(key, shape, jnp.float32, -a, a)


def init_params(key, n_input, n_features, n_output):
    k1, k2, k3 = jax.random.split(key, 3)
    gain_relu = math.sqrt(2.0)      # calculate_gain('relu')
    gain_lin = 1.0                  # calculate_gain('linear')
    # Weights stored in bf16: halves weight DMA bytes and feeds the bf16
    # MXU (accumulation stays fp32 inside the kernel).
    # w1/w2 are stored as (in, out) == PyTorch weight.T so each layer is
    # x @ W + b; w3 is kept in PyTorch (out, in) layout so the last layer can
    # be an A @ B^T matmul producing the transposed (lane-dense) output.
    w1 = xavier_uniform(k1, n_input, n_features, (n_input, n_features),
                        gain_relu).astype(jnp.bfloat16)
    w2 = xavier_uniform(k2, n_features, n_features, (n_features, n_features),
                        gain_relu).astype(jnp.bfloat16)
    w3t = xavier_uniform(k3, n_features, n_output, (n_output, n_features),
                         gain_lin).astype(jnp.bfloat16)
    # TODO(synk): nn.Linear's default bias init is U(-1/sqrt(fan_in), 1/sqrt(fan_in));
    # deterministic zeros are kept for this synthetic correctness check.
    b1 = jnp.zeros((1, n_features), jnp.float32)
    b2 = jnp.zeros((1, n_features), jnp.float32)
    b3 = jnp.zeros((n_output, 1), jnp.float32)
    return (w1, b1, w2, b2, w3t, b3)


def reference_forward(state, params):
    # Pure-JAX fp32 reference (weights upcast from bf16 storage).
    x = jnp.squeeze(state, axis=1).astype(jnp.float32)
    w1, b1, w2, b2, w3t, b3 = params
    h1 = jax.nn.relu(x @ w1.astype(jnp.float32) + b1)
    h2 = jax.nn.relu(h1 @ w2.astype(jnp.float32) + b2)
    return h2 @ w3t.astype(jnp.float32).T + b3.T


if __name__ == "__main__":
    # Shapes consistent with the module: state (B, 1, n_input).
    n_input, n_features, n_output = 6, 32, 2
    key = jax.random.PRNGKey(0)
    k_params, k_small, k_big = jax.random.split(key, 3)
    params = init_params(k_params, n_input, n_features, n_output)

    # 1) Small batch: single-tile path.
    B = 8
    state = jax.random.normal(k_small, (B, 1, n_input), jnp.float32)
    out = jax.block_until_ready(actor_forward(state, params))
    ref = reference_forward(state, params)
    assert out.shape == (B, n_output)
    # bf16 matmul operands (fp32 accumulation) vs fp32 reference: ~1e-2-level
    # relative deviation is expected and acceptable for an SAC actor.
    assert jnp.allclose(out, ref, atol=5e-2, rtol=5e-2)

    # 2) Larger, non-multiple batch: multi-tile grid (two "parallel" steps on
    # v7x) with a partial last block.
    B2 = 300
    state2 = jax.random.normal(k_big, (B2, 1, n_input), jnp.float32)
    out2 = jax.block_until_ready(actor_forward(state2, params))
    ref2 = reference_forward(state2, params)
    assert out2.shape == (B2, n_output)
    assert jnp.allclose(out2, ref2, atol=5e-2, rtol=5e-2)

    print("KERNEL_OK")
</pallas_src>

<mosaic_0001>
module attributes {stable_mosaic.version = 11 : i64} {
  func.func @actor_kernel(%arg0: i32, %arg1: memref<8x1x6xf32, #tpu.memory_space<vmem>>, %arg2: memref<6x32xbf16, #tpu.memory_space<vmem>>, %arg3: memref<1x32xf32, #tpu.memory_space<vmem>>, %arg4: memref<32x32xbf16, #tpu.memory_space<vmem>>, %arg5: memref<1x32xf32, #tpu.memory_space<vmem>>, %arg6: memref<2x32xbf16, #tpu.memory_space<vmem>>, %arg7: memref<2x1xf32, #tpu.memory_space<vmem>>, %arg8: memref<2x8xf32, #tpu.memory_space<vmem>>) attributes {dimension_semantics = [#tpu.dimension_semantics<parallel>], iteration_bounds = array<i64: 1>, scalar_prefetch = 0 : i64, scratch_operands = 0 : i64, tpu.core_type = #tpu.core_type<tc>, window_params = [{transform_indices = @transform_0, window_bounds = array<i64: 8, 1, 6>}, {pipeline_mode = #tpu.pipeline_mode<synchronous>, transform_indices = @transform_1, window_bounds = array<i64: 6, 32>}, {pipeline_mode = #tpu.pipeline_mode<synchronous>, transform_indices = @transform_2, window_bounds = array<i64: 1, 32>}, {pipeline_mode = #tpu.pipeline_mode<synchronous>, transform_indices = @transform_3, window_bounds = array<i64: 32, 32>}, {pipeline_mode = #tpu.pipeline_mode<synchronous>, transform_indices = @transform_4, window_bounds = array<i64: 1, 32>}, {pipeline_mode = #tpu.pipeline_mode<synchronous>, transform_indices = @transform_5, window_bounds = array<i64: 2, 32>}, {pipeline_mode = #tpu.pipeline_mode<synchronous>, transform_indices = @transform_6, window_bounds = array<i64: 2, 1>}, {transform_indices = @transform_7, window_bounds = array<i64: 2, 8>}]} {
    %c0 = arith.constant 0 : index
    %c0_0 = arith.constant 0 : index
    %c0_1 = arith.constant 0 : index
    %0 = vector.load %arg1[%c0, %c0_0, %c0_1] : memref<8x1x6xf32, #tpu.memory_space<vmem>>, vector<8x1x6xf32>
    %1 = vector.shape_cast %0 : vector<8x1x6xf32> to vector<8x6xf32>
    %2 = arith.truncf %1 : vector<8x6xf32> to vector<8x6xbf16>
    %c0_2 = arith.constant 0 : index
    %c0_3 = arith.constant 0 : index
    %3 = vector.load %arg2[%c0_2, %c0_3] : memref<6x32xbf16, #tpu.memory_space<vmem>>, vector<6x32xbf16>
    %cst = arith.constant dense<0.000000e+00> : vector<8x32xf32>
    %4 = tpu.matmul %2, %3, %cst {dimension_numbers = #tpu.dot_dimension_numbers<[1], [0], [0], [1], [0, 0, 1, 1], [], []>} : vector<8x6xbf16>, vector<6x32xbf16>, vector<8x32xf32> -> vector<8x32xf32>
    %c0_4 = arith.constant 0 : index
    %c0_5 = arith.constant 0 : index
    %5 = vector.load %arg3[%c0_4, %c0_5] : memref<1x32xf32, #tpu.memory_space<vmem>>, vector<1x32xf32>
    %6 = vector.broadcast %5 : vector<1x32xf32> to vector<8x32xf32>
    %7 = arith.addf %4, %6 : vector<8x32xf32>
    %cst_6 = arith.constant 0.000000e+00 : f32
    %8 = vector.broadcast %cst_6 : f32 to vector<8x32xf32>
    %9 = arith.maximumf %7, %8 : vector<8x32xf32>
    %10 = arith.truncf %9 : vector<8x32xf32> to vector<8x32xbf16>
    %c0_7 = arith.constant 0 : index
    %c0_8 = arith.constant 0 : index
    %11 = vector.load %arg4[%c0_7, %c0_8] : memref<32x32xbf16, #tpu.memory_space<vmem>>, vector<32x32xbf16>
    %cst_9 = arith.constant dense<0.000000e+00> : vector<8x32xf32>
    %12 = tpu.matmul %10, %11, %cst_9 {dimension_numbers = #tpu.dot_dimension_numbers<[1], [0], [0], [1], [0, 0, 1, 1], [], []>} : vector<8x32xbf16>, vector<32x32xbf16>, vector<8x32xf32> -> vector<8x32xf32>
    %c0_10 = arith.constant 0 : index
    %c0_11 = arith.constant 0 : index
    %13 = vector.load %arg5[%c0_10, %c0_11] : memref<1x32xf32, #tpu.memory_space<vmem>>, vector<1x32xf32>
    %14 = vector.broadcast %13 : vector<1x32xf32> to vector<8x32xf32>
    %15 = arith.addf %12, %14 : vector<8x32xf32>
    %cst_12 = arith.constant 0.000000e+00 : f32
    %16 = vector.broadcast %cst_12 : f32 to vector<8x32xf32>
    %17 = arith.maximumf %15, %16 : vector<8x32xf32>
    %c0_13 = arith.constant 0 : index
    %c0_14 = arith.constant 0 : index
    %18 = vector.load %arg6[%c0_13, %c0_14] : memref<2x32xbf16, #tpu.memory_space<vmem>>, vector<2x32xbf16>
    %19 = arith.truncf %17 : vector<8x32xf32> to vector<8x32xbf16>
    %cst_15 = arith.constant dense<0.000000e+00> : vector<2x8xf32>
    %20 = tpu.matmul %18, %19, %cst_15 {dimension_numbers = #tpu.dot_dimension_numbers<[1], [1], [0], [0], [0, 0, 1, 0], [], []>} : vector<2x32xbf16>, vector<8x32xbf16>, vector<2x8xf32> -> vector<2x8xf32>
    %c0_16 = arith.constant 0 : index
    %c0_17 = arith.constant 0 : index
    %21 = vector.load %arg7[%c0_16, %c0_17] : memref<2x1xf32, #tpu.memory_space<vmem>>, vector<2x1xf32>
    %22 = vector.broadcast %21 : vector<2x1xf32> to vector<2x8xf32>
    %23 = arith.addf %20, %22 : vector<2x8xf32>
    %c0_18 = arith.constant 0 : index
    %c0_19 = arith.constant 0 : index
    %24 = vector.load %arg8[%c0_18, %c0_19] : memref<2x8xf32, #tpu.memory_space<vmem>>, vector<2x8xf32>
    tpu.vector_store %arg8[%c0_18, %c0_19], %23 {strides = array<i32>} : memref<2x8xf32, #tpu.memory_space<vmem>>, vector<2x8xf32>,
    return
  }
  func.func @transform_0(%arg0: i32) -> (i32, i32, i32) {
    %c0_i32 = arith.constant 0 : i32
    %c0_i32_0 = arith.constant 0 : i32
    %c0_i32_1 = arith.constant 0 : i32
    return %arg0, %c0_i32, %c0_i32_0 : i32, i32, i32
  }
  func.func @transform_1(%arg0: i32) -> (i32, i32) {
    %c0_i32 = arith.constant 0 : i32
    %c0_i32_0 = arith.constant 0 : i32
    %c0_i32_1 = arith.constant 0 : i32
    return %c0_i32, %c0_i32_0 : i32, i32
  }
  func.func @transform_2(%arg0: i32) -> (i32, i32) {
    %c0_i32 = arith.constant 0 : i32
    %c0_i32_0 = arith.constant 0 : i32
    %c0_i32_1 = arith.constant 0 : i32
    return %c0_i32, %c0_i32_0 : i32, i32
  }
  func.func @transform_3(%arg0: i32) -> (i32, i32) {
    %c0_i32 = arith.constant 0 : i32
    %c0_i32_0 = arith.constant 0 : i32
    %c0_i32_1 = arith.constant 0 : i32
    return %c0_i32, %c0_i32_0 : i32, i32
  }
  func.func @transform_4(%arg0: i32) -> (i32, i32) {
    %c0_i32 = arith.constant 0 : i32
    %c0_i32_0 = arith.constant 0 : i32
    %c0_i32_1 = arith.constant 0 : i32
    return %c0_i32, %c0_i32_0 : i32, i32
  }
  func.func @transform_5(%arg0: i32) -> (i32, i32) {
    %c0_i32 = arith.constant 0 : i32
    %c0_i32_0 = arith.constant 0 : i32
    %c0_i32_1 = arith.constant 0 : i32
    return %c0_i32, %c0_i32_0 : i32, i32
  }
  func.func @transform_6(%arg0: i32) -> (i32, i32) {
    %c0_i32 = arith.constant 0 : i32
    %c0_i32_0 = arith.constant 0 : i32
    %c0_i32_1 = arith.constant 0 : i32
    return %c0_i32, %c0_i32_0 : i32, i32
  }
  func.func @transform_7(%arg0: i32) -> (i32, i32) {
    %c0_i32 = arith.constant 0 : i32
    %c0_i32_0 = arith.constant 0 : i32
    return %c0_i32, %arg0 : i32, i32
  }
}

</mosaic_0001>

<llo_original>
// kernel: tpu_custom_call.1
$region0: #{tpu_custom_call.1}
  #allocation0 [shape = 'u32[]', space=smem, size = 0x4, offset = 0x4, fixed_abs, tag = 'smem constant byte address 0x4 - core index']
  #allocation1 [shape = 'u32[144,128]{1,0:T(1,128)}', space=vmem, size = 0x12000, scoped, tag = 'internal scratch']
  %s0 = inlined_call_operand.vmem [shape: f32[8,1,6], index: 0, kind: input, shape index: {}]
  %s1 = inlined_call_operand.vmem [shape: bf16[6,32], index: 1, kind: input, shape index: {}]
  %s2 = inlined_call_operand.vmem [shape: f32[1,32], index: 2, kind: input, shape index: {}]
  %s3 = inlined_call_operand.vmem [shape: bf16[32,32], index: 3, kind: input, shape index: {}]
  %s4 = inlined_call_operand.vmem [shape: f32[1,32], index: 4, kind: input, shape index: {}]
  %s5 = inlined_call_operand.vmem [shape: bf16[2,32], index: 5, kind: input, shape index: {}]
  %s6 = inlined_call_operand.vmem [shape: f32[2,1], index: 6, kind: input, shape index: {}]
  %s7 = inlined_call_operand.hbm [shape: f32[2,8], index: 7, kind: output, shape index: {}]
  %s8 = sld [smem:[#allocation0]]
  $region38: #{tpu_custom_call.1} parent=0
    _
  %s10 = ssub.s32 1, %s8
  %s11 = scalar_select 0, %s10, %s8
  $region1: #{tpu_custom_call.1} parent=0
    #allocation2 [shape = 'u8[1024]{0}', space=vmem, size = 0x400, scoped, tag = 'output window, operand 0, single buffered']
    #allocation3 [shape = 's32[1]{0}', space=sflag, size = 0x4, scoped, tag = 'scoped memory for tpu_custom_call.1']
    %12 = vsyncpa [#allocation3], 0
    // Predicated region
    $region2: #{tpu_custom_call.1} parent=1 // pred_check
      _
    $region3: #{tpu_custom_call.1} parent=1 // pred_check_branch
      %14 = sbr.rel (0) target = $region5
    $region4: #{tpu_custom_call.1} parent=1 // pred_region
      _
    $region5: #{tpu_custom_call.1} parent=1 // pred_fallthru
      _
    // Predicated region
    $region6: #{tpu_custom_call.1} parent=1 // pred_check
      _
    $region7: #{tpu_custom_call.1} parent=1 // pred_check_branch
      %16 = sbr.rel (0) target = $region9
    $region8: #{tpu_custom_call.1} parent=1 // pred_region
      _
    $region9: #{tpu_custom_call.1} parent=1 // pred_fallthru
      _
    // Predicated region
    $region10: #{tpu_custom_call.1} parent=1 // pred_check
      _
    $region11: #{tpu_custom_call.1} parent=1 // pred_check_branch
      %18 = sbr.rel (0) target = $region13
    $region12: #{tpu_custom_call.1} parent=1 // pred_region
      _
    $region13: #{tpu_custom_call.1} parent=1 // pred_fallthru
      _
    // Predicated region
    $region14: #{tpu_custom_call.1} parent=1 // pred_check
      _
    $region15: #{tpu_custom_call.1} parent=1 // pred_check_branch
      %20 = sbr.rel (0) target = $region17
    $region16: #{tpu_custom_call.1} parent=1 // pred_region
      _
    $region17: #{tpu_custom_call.1} parent=1 // pred_fallthru
      _
    // Predicated region
    $region18: #{tpu_custom_call.1} parent=1 // pred_check
      _
    $region19: #{tpu_custom_call.1} parent=1 // pred_check_branch
      %22 = sbr.rel (0) target = $region21
    $region20: #{tpu_custom_call.1} parent=1 // pred_region
      _
    $region21: #{tpu_custom_call.1} parent=1 // pred_fallthru
      _
    // Predicated region
    $region22: #{tpu_custom_call.1} parent=1 // pred_check
      _
    $region23: #{tpu_custom_call.1} parent=1 // pred_check_branch
      %24 = sbr.rel (0) target = $region25
    $region24: #{tpu_custom_call.1} parent=1 // pred_region
      _
    $region25: #{tpu_custom_call.1} parent=1 // pred_fallthru
      _
    // Predicated region
    $region26: #{tpu_custom_call.1} parent=1 // pred_check
      _
    $region27: #{tpu_custom_call.1} parent=1 // pred_check_branch
      %26 = sbr.rel (0) target = $region29
    $region28: #{tpu_custom_call.1} parent=1 // pred_region
      _
    $region29: #{tpu_custom_call.1} parent=1 // pred_fallthru
      _
    %v28 = vld [vmem:[%s0] sm:$0x1]
    %v29 = vld [vmem:[%s0 + $0x1] sm:$0x1]
    %v30 = vld [vmem:[%s0 + $0x2] sm:$0x1]
    %v31 = vld [vmem:[%s0 + $0x3] sm:$0x1]
    %v32 = vld [vmem:[%s0 + $0x4] sm:$0x1]
    %v33 = vld [vmem:[%s0 + $0x5] sm:$0x1]
    %v34 = vld [vmem:[%s0 + $0x6] sm:$0x1]
    %v35 = vld [vmem:[%s0 + $0x7] sm:$0x1]
    %v36 = vpack.c.bf16 %v28, %v28
    %v37 = vpack.c.bf16 %v29, %v29
    %v38 = vpack.c.bf16 %v30, %v30
    %v39 = vpack.c.bf16 %v31, %v31
    %v40 = vpack.c.bf16 %v32, %v32
    %v41 = vpack.c.bf16 %v33, %v33
    %v42 = vpack.c.bf16 %v34, %v34
    %v43 = vpack.c.bf16 %v35, %v35
    %v44 = vld [vmem:[%s1] sm:$0x7]
    %v45 = vld [vmem:[%s2] sm:$0x1]
    %v47 = vlaneseq
    %v48 = vshrl.u32 %v47, 7
    %v49 = vsub.s32 0, %v48
    %v50 = vrot.slane %v45, %v49
    %v60 = vunpack.c.l.b16 %v36
    %v61 = vunpack.c.l.b16 %v37
    %v62 = vunpack.c.l.b16 %v38
    %v63 = vunpack.c.l.b16 %v39
    %v64 = vunpack.c.l.b16 %v40
    %v65 = vunpack.c.l.b16 %v41
    %v66 = vunpack.c.l.b16 %v42
    %v67 = vunpack.c.l.b16 %v43
    %v68 = vrot.slane %v61, 7
    %vm69 = vcmask 1041409
    %v70 = vsel %vm69, %v68, %v60
    %v71 = vrot.slane %v62, 6
    %vm72 = vcmask 1042434
    %v73 = vsel %vm72, %v71, %v70
    %v74 = vrot.slane %v63, 5
    %vm75 = vcmask 1043459
    %v76 = vsel %vm75, %v74, %v73
    %v77 = vrot.slane %v64, 4
    %vm78 = vcmask 1044484
    %v79 = vsel %vm78, %v77, %v76
    %v80 = vrot.slane %v65, 3
    %vm81 = vcmask 1045509
    %v82 = vsel %vm81, %v80, %v79
    %v83 = vrot.slane %v66, 2
    %vm84 = vcmask 1046534
    %v85 = vsel %vm84, %v83, %v82
    %v86 = vrot.slane %v67, 1
    %vm87 = vcmask 1047559
    %v88 = vsel %vm87, %v86, %v85
    %v89 = vpack.c.b16 %v88, %v88
    %vm90 = vcmask 48128
    %v92 = vsel %vm90, %v89, 0
    %vm94 = vcmask 1042432
    %v96 = vsel %vm94, %v44, 0
    %98 = vmatprep.subr.bf16.mxu0 0
    %99 = vmatpush1.bf16.msra.mxu0 %v96
    %100 = vmatprep.subr.bf16.mxu0 0
    %101 = vmatpush1.bf16.msra.mxu0 0
    %102 = vmatprep.subr.bf16.mxu0 0
    %103 = vmatpush1.bf16.msra.mxu0 0
    %104 = vmatprep.subr.bf16.mxu0 0
    %105 = vmatpush1.bf16.msra.mxu0 0
    %106 = vmatprep.subr.bf16.mxu0 0
    %107 = vmatpush1.bf16.msra.mxu0 0
    %108 = vmatprep.subr.bf16.mxu0 0
    %109 = vmatpush1.bf16.msra.mxu0 0
    %110 = vmatprep.subr.bf16.mxu0 0
    %111 = vmatpush1.bf16.msra.mxu0 0
    %112 = vmatprep.subr.bf16.mxu0 0
    %113 = vmatpush1.bf16.msra.mxu0 0
    %114 = vmatprep.subr.bf16.mxu0 0
    %115 = vmatpush1.bf16.msra.mxu0 0
    %116 = vmatprep.subr.bf16.mxu0 0
    %117 = vmatpush1.bf16.msra.mxu0 0
    %118 = vmatprep.subr.bf16.mxu0 0
    %119 = vmatpush1.bf16.msra.mxu0 0
    %120 = vmatprep.subr.bf16.mxu0 0
    %121 = vmatpush1.bf16.msra.mxu0 0
    %122 = vmatprep.subr.bf16.mxu0 0
    %123 = vmatpush1.bf16.msra.mxu0 0
    %124 = vmatprep.subr.bf16.mxu0 0
    %125 = vmatpush1.bf16.msra.mxu0 0
    %126 = vmatprep.subr.bf16.mxu0 0
    %127 = vmatpush1.bf16.msra.mxu0 0
    %128 = vmatprep.subr.bf16.mxu0 0
    %129 = vmatpush1.bf16.msra.mxu0 0
    %130 = vmatprep.mubr.bf16.mxu0 0
    %131 = vmatmul.mubr.bf16.gmra.mrb[0].mxu0 %v92
    %v132 = vpop.f32.mrb[0].mxu0
    %v133 = vadd.f32 %v50, %v132
    %v134 = vpop.f32.mrb[0].mxu0
    %v135 = vpop.f32.mrb[0].mxu0
    %v136 = vpop.f32.mrb[0].mxu0
    %137 = vdwg.mxu0
    %v138 = vmax.f32 %v133, 0.0
    %v139 = vpack.c.bf16 %v138, %v138
    %v140 = vld [vmem:[%s3] sm:$0xf]
    %v141 = vld [vmem:[%s3 + $0x4] sm:$0xf]
    %v142 = vld [vmem:[%s3 + $0x8] sm:$0xf]
    %v143 = vld [vmem:[%s3 + $0xc] sm:$0xf]
    %v144 = vld [vmem:[%s4] sm:$0x1]
    %v146 = vlaneseq
    %v147 = vshrl.u32 %v146, 7
    %v148 = vsub.s32 0, %v147
    %v149 = vrot.slane %v144, %v148
    %v155 = vunpack.c.l.b16 %v140
    %v156 = vunpack.c.l.b16 %v141
    %v157 = vunpack.c.l.b16 %v142
    %v158 = vunpack.c.l.b16 %v143
    %v159 = vpack.c.b16 %v156, %v155
    %v160 = vpack.c.b16 %v158, %v157
    %vm163 = vcmask 261120
    %v165 = vsel %vm163, %v139, 0
    %167 = vmatprep.subr.bf16.mxu0 0
    %168 = vmatpush1.bf16.msra.mxu0 %v159
    %169 = vmatprep.subr.bf16.mxu0 0
    %170 = vmatpush1.bf16.msra.mxu0 %v160
    %171 = vmatprep.subr.bf16.mxu0 0
    %172 = vmatpush1.bf16.msra.mxu0 0
    %173 = vmatprep.subr.bf16.mxu0 0
    %174 = vmatpush1.bf16.msra.mxu0 0
    %175 = vmatprep.subr.bf16.mxu0 0
    %176 = vmatpush1.bf16.msra.mxu0 0
    %177 = vmatprep.subr.bf16.mxu0 0
    %178 = vmatpush1.bf16.msra.mxu0 0
    %179 = vmatprep.subr.bf16.mxu0 0
    %180 = vmatpush1.bf16.msra.mxu0 0
    %181 = vmatprep.subr.bf16.mxu0 0
    %182 = vmatpush1.bf16.msra.mxu0 0
    %183 = vmatprep.subr.bf16.mxu0 0
    %184 = vmatpush1.bf16.msra.mxu0 0
    %185 = vmatprep.subr.bf16.mxu0 0
    %186 = vmatpush1.bf16.msra.mxu0 0
    %187 = vmatprep.subr.bf16.mxu0 0
    %188 = vmatpush1.bf16.msra.mxu0 0
    %189 = vmatprep.subr.bf16.mxu0 0
    %190 = vmatpush1.bf16.msra.mxu0 0
    %191 = vmatprep.subr.bf16.mxu0 0
    %192 = vmatpush1.bf16.msra.mxu0 0
    %193 = vmatprep.subr.bf16.mxu0 0
    %194 = vmatpush1.bf16.msra.mxu0 0
    %195 = vmatprep.subr.bf16.mxu0 0
    %196 = vmatpush1.bf16.msra.mxu0 0
    %197 = vmatprep.subr.bf16.mxu0 0
    %198 = vmatpush1.bf16.msra.mxu0 0
    %199 = vmatprep.mubr.bf16.mxu0 0
    %200 = vmatmul.mubr.bf16.gmra.mrb[0].mxu0 %v165
    %v201 = vpop.f32.mrb[0].mxu0
    %v202 = vadd.f32 %v149, %v201
    %v203 = vpop.f32.mrb[0].mxu0
    %v204 = vpop.f32.mrb[0].mxu0
    %v205 = vpop.f32.mrb[0].mxu0
    %206 = vdwg.mxu0
    %v207 = vmax.f32 %v202, 0.0
    %v208 = vld [vmem:[%s5] sm:$0x1]
    %v209 = vpack.c.bf16 %v207, %v207
    %v210 = vld [vmem:[%s6] sm:$0x3]
    %212 = vset.pattern.permute.xlu0 0
    %213 = vperm.xlu0 %212, %v210
    %v214 = vpop.permute.xlu0 %213
    %v217 = vsel %vm163, %v208, 0
    %v220 = vsel %vm163, %v209, 0
    %222 = vmatprep.subr.bf16.mxu0 0
    %223 = vmatpush1.bf16.xpose.msra.mxu0 %v220
    %224 = vmatprep.subr.bf16.mxu0 0
    %225 = vmatpush1.bf16.xpose.msra.mxu0 0
    %226 = vmatprep.subr.bf16.mxu0 0
    %227 = vmatpush1.bf16.xpose.msra.mxu0 0
    %228 = vmatprep.subr.bf16.mxu0 0
    %229 = vmatpush1.bf16.xpose.msra.mxu0 0
    %230 = vmatprep.subr.bf16.mxu0 0
    %231 = vmatpush1.bf16.xpose.msra.mxu0 0
    %232 = vmatprep.subr.bf16.mxu0 0
    %233 = vmatpush1.bf16.xpose.msra.mxu0 0
    %234 = vmatprep.subr.bf16.mxu0 0
    %235 = vmatpush1.bf16.xpose.msra.mxu0 0
    %236 = vmatprep.subr.bf16.mxu0 0
    %237 = vmatpush1.bf16.xpose.msra.mxu0 0
    %238 = vmatprep.subr.bf16.mxu0 0
    %239 = vmatpush1.bf16.xpose.msra.mxu0 0
    %240 = vmatprep.subr.bf16.mxu0 0
    %241 = vmatpush1.bf16.xpose.msra.mxu0 0
    %242 = vmatprep.subr.bf16.mxu0 0
    %243 = vmatpush1.bf16.xpose.msra.mxu0 0
    %244 = vmatprep.subr.bf16.mxu0 0
    %245 = vmatpush1.bf16.xpose.msra.mxu0 0
    %246 = vmatprep.subr.bf16.mxu0 0
    %247 = vmatpush1.bf16.xpose.msra.mxu0 0
    %248 = vmatprep.subr.bf16.mxu0 0
    %249 = vmatpush1.bf16.xpose.msra.mxu0 0
    %250 = vmatprep.subr.bf16.mxu0 0
    %251 = vmatpush1.bf16.xpose.msra.mxu0 0
    %252 = vmatprep.subr.bf16.mxu0 0
    %253 = vmatpush1.bf16.xpose.msra.mxu0 0
    %254 = vmatprep.mubr.bf16.mxu0 0
    %255 = vmatmul.mubr.bf16.gmra.mrb[0].mxu0 %v217
    %v256 = vpop.f32.mrb[0].mxu0
    %v257 = vadd.f32 %v214, %v256
    %v258 = vpop.f32.mrb[0].mxu0
    %v259 = vpop.f32.mrb[0].mxu0
    %v260 = vpop.f32.mrb[0].mxu0
    %261 = vdwg.mxu0
    %vm262 = vcmask 58368
    %263 = vst.msk [vmem:[#allocation2] sm:$0x3] %vm262, %v257
    // Predicated region
    $region30: #{tpu_custom_call.1} parent=1 // pred_check
      _
    $region31: #{tpu_custom_call.1} parent=1 // pred_check_branch
      %265 = sbr.rel (0) target = $region33
    $region32: #{tpu_custom_call.1} parent=1 // pred_region
      %s267 = ssub.s32 32, 32
      %268 = vsyncadd [#allocation3], %s267
      %s270 = sshll.u32 [#allocation2], 4
      %s271 = int_to_ptr.vmem [resolvable:$true] %s270
      %273 = dma.vmem_to_hbm [thread:$0]  %s271, 32, %s7, [#allocation3]
    $region33: #{tpu_custom_call.1} parent=1 // pred_fallthru
      _
    // Predicated region
    $region34: #{tpu_custom_call.1} parent=1 // pred_check
      _
    $region35: #{tpu_custom_call.1} parent=1 // pred_check_branch
      %275 = sbr.rel (0) target = $region37
    $region36: #{tpu_custom_call.1} parent=1 // pred_region
      %276 = dma.done [#allocation3], 32
    $region37: #{tpu_custom_call.1} parent=1 // pred_fallthru
      _
    %277 = vsyncpa [#allocation3], 1

</llo_original>
